<compile_context>
chip_gen: v7x
topology: tpu7x:2x2x1
jax: 0.10.0
libtpu: 0.0.40
codegen_flags: <defaults>
</compile_context>

<pallas_src>
import numpy as np

import jax
import jax.numpy as jnp
from jax.experimental import pallas as pl
from jax.experimental.pallas import tpu as pltpu


# ---------------------------------------------------------------------------
# Kernel
# ---------------------------------------------------------------------------
def basic_block_kernel(x_ref, w1_ref, w2_ref, b1_ref, b2_ref, out_ref):
    # x_ref  : (1, H, W*C)   bf16  lane-dense activation tile (one image)
    # w*_ref : (W*C, 3*W*C)  bf16  banded conv weight (BN scale pre-folded,
    #                              dy blocks along columns)
    # b*_ref : (1, W*C)      f32   folded BatchNorm bias, tiled over W
    # out_ref: (1, H, W*C)   f32
    H = out_ref.shape[1]
    WC = out_ref.shape[2]

    x16 = x_ref[0]                         # (H, WC) bf16
    x32 = x16.astype(jnp.float32)          # residual identity in f32

    def shift_rows(v, shift):
        # result[h] = v[h - shift], zero-filled at the boundary (H padding).
        # Sublane-only copy; cheap and guaranteed-correct at this size.
        zrow = jnp.zeros((abs(shift), WC), jnp.float32)
        if shift > 0:
            return jnp.concatenate([zrow, v[: H - shift]], axis=0)
        return jnp.concatenate([v[-shift:], zrow], axis=0)

    def conv3x3(inp16, w_ref):
        # Single MXU matmul: width taps + width zero-padding live inside the
        # banded weight; the three dy tap groups are lane-aligned column blocks.
        outs = jnp.dot(inp16, w_ref[...],
                       preferred_element_type=jnp.float32)     # (H, 3*WC) f32
        a = outs[:, 0:WC]            # dy=0: input row h contributes to out h+1
        b = outs[:, WC:2 * WC]       # dy=1: same row
        c = outs[:, 2 * WC:3 * WC]   # dy=2: input row h contributes to out h-1
        return shift_rows(a, 1) + b + shift_rows(c, -1)

    # conv1 (BN1 scale folded into weights) -> +bias -> relu
    y = jnp.maximum(conv3x3(x16, w1_ref) + b1_ref[...], 0.0)

    # conv2 (BN2 scale folded into weights) -> +bias
    z = conv3x3(y.astype(jnp.bfloat16), w2_ref) + b2_ref[...]

    # residual add + relu; single unmasked lane-dense store
    out_ref[0] = jnp.maximum(z + x32, 0.0)


# ---------------------------------------------------------------------------
# One-time host-side parameter preparation (outside the jitted hot path)
# ---------------------------------------------------------------------------
def build_row_conv_weight(w_oihw, width, out_scale=None):
    """OIHW (Cout, Cin, 3, 3) -> banded (W*Cin, 3*W*Cout) matrix.

    Column block dy in {0,1,2} holds the taps that read padded input row
    (h_out + dy - 1); the dx taps and the width-wise zero padding are encoded
    in the band structure, so one (H, W*Cin) @ (W*Cin, 3*W*Cout) matmul plus
    two row shifts performs the whole 3x3 convolution.  If `out_scale`
    (per-output-channel, e.g. folded BN scale) is given it is baked into the
    weight columns so the kernel skips the per-element scale multiply.
    """
    w = np.asarray(w_oihw, np.float32)
    cout, cin, kh, kw = w.shape
    if out_scale is not None:
        w = w * np.asarray(out_scale, np.float32)[:, None, None, None]
    big = np.zeros((width * cin, kh * width * cout), np.float32)
    for dy in range(kh):
        for dx in range(kw):
            for wo in range(width):
                wi = wo + dx - 1
                if 0 <= wi < width:
                    big[wi * cin:(wi + 1) * cin,
                        dy * width * cout + wo * cout:
                        dy * width * cout + (wo + 1) * cout] = w[:, :, dy, dx].T
    return big


def _fold_bn(gamma, beta, mean, var, eps=1e-5):
    scale = gamma / jnp.sqrt(var + eps)
    bias = beta - mean * scale
    return scale, bias


# ---------------------------------------------------------------------------
# Jitted wrapper
# ---------------------------------------------------------------------------
@jax.jit
def basic_block_pallas(x_nchw, w1_big, b1t, w2_big, b2t):
    N, C, H, W = x_nchw.shape
    WC = W * C
    # NCHW -> NHWC -> (N, H, W*C) lane-dense, bf16 activations (the transpose is
    # only needed because the API boundary is NCHW; a native NHWC pipeline
    # would skip it).
    x = jnp.transpose(x_nchw, (0, 2, 3, 1)).reshape(N, H, WC).astype(jnp.bfloat16)

    out = pl.pallas_call(
        basic_block_kernel,
        out_shape=jax.ShapeDtypeStruct((N, H, WC), jnp.float32),
        grid_spec=pltpu.PrefetchScalarGridSpec(
            num_scalar_prefetch=0,
            grid=(N,),
            in_specs=[
                pl.BlockSpec((1, H, WC), lambda n: (n, 0, 0)),       # x
                pl.BlockSpec((WC, 3 * WC), lambda n: (0, 0)),        # w1 (resident)
                pl.BlockSpec((WC, 3 * WC), lambda n: (0, 0)),        # w2 (resident)
                pl.BlockSpec((1, WC), lambda n: (0, 0)),             # b1
                pl.BlockSpec((1, WC), lambda n: (0, 0)),             # b2
            ],
            out_specs=pl.BlockSpec((1, H, WC), lambda n: (n, 0, 0)),
        ),
        compiler_params=pltpu.CompilerParams(
            dimension_semantics=("parallel",),   # batch axis shards across TCs
        ),
    )(x, w1_big, w2_big, b1t, b2t)

    return jnp.transpose(out.reshape(N, H, W, C), (0, 3, 1, 2))  # back to NCHW


# ---------------------------------------------------------------------------
# Pure-JAX reference (bf16-in / f32-accumulate, scale applied post-conv as in
# the original module) for validation
# ---------------------------------------------------------------------------
def basic_block_reference(x_nchw, w1_oihw, s1, b1, w2_oihw, s2, b2):
    x = jnp.transpose(x_nchw, (0, 2, 3, 1)).astype(jnp.bfloat16)
    w1 = jnp.transpose(w1_oihw, (2, 3, 1, 0)).astype(jnp.bfloat16)  # HWIO
    w2 = jnp.transpose(w2_oihw, (2, 3, 1, 0)).astype(jnp.bfloat16)
    dn = ("NHWC", "HWIO", "NHWC")
    y = jax.lax.conv_general_dilated(x, w1, (1, 1), "SAME", dimension_numbers=dn,
                                     preferred_element_type=jnp.float32)
    y = jnp.maximum(y * s1 + b1, 0.0)
    z = jax.lax.conv_general_dilated(y.astype(jnp.bfloat16), w2, (1, 1), "SAME",
                                     dimension_numbers=dn,
                                     preferred_element_type=jnp.float32)
    z = z * s2 + b2 + x.astype(jnp.float32)
    z = jnp.maximum(z, 0.0)
    return jnp.transpose(z, (0, 3, 1, 2))


if __name__ == "__main__":
    # BasicBlock(inplanes=8, planes=8, stride=1, downsample=None)
    # W * C = 16 * 8 = 128  -> lane-dense tiles.
    N, C, H, W = 2, 8, 16, 16
    key = jax.random.PRNGKey(0)
    ks = jax.random.split(key, 11)

    x = jax.random.normal(ks[0], (N, C, H, W), jnp.float32)          # NCHW
    w1 = jax.random.normal(ks[1], (C, C, 3, 3), jnp.float32) * 0.1   # OIHW
    w2 = jax.random.normal(ks[2], (C, C, 3, 3), jnp.float32) * 0.1   # OIHW

    # BatchNorm parameters + running stats (deterministic, synthetic)
    g1 = 1.0 + 0.1 * jax.random.normal(ks[3], (C,), jnp.float32)
    be1 = 0.1 * jax.random.normal(ks[4], (C,), jnp.float32)
    m1 = 0.1 * jax.random.normal(ks[5], (C,), jnp.float32)
    v1 = 1.0 + 0.1 * jnp.abs(jax.random.normal(ks[6], (C,), jnp.float32))
    g2 = 1.0 + 0.1 * jax.random.normal(ks[7], (C,), jnp.float32)
    be2 = 0.1 * jax.random.normal(ks[8], (C,), jnp.float32)
    m2 = 0.1 * jax.random.normal(ks[9], (C,), jnp.float32)
    v2 = 1.0 + 0.1 * jnp.abs(jax.random.normal(ks[10], (C,), jnp.float32))

    s1, b1 = _fold_bn(g1, be1, m1, v1)
    s2, b2 = _fold_bn(g2, be2, m2, v2)

    # One-time weight / BN prep outside the jitted call: banded matmul weights
    # with the BN scale folded in (bf16), BN biases tiled to the lane-dense
    # (1, W*C) layout (f32).
    w1_big = jnp.asarray(build_row_conv_weight(w1, W, out_scale=s1), jnp.bfloat16)
    w2_big = jnp.asarray(build_row_conv_weight(w2, W, out_scale=s2), jnp.bfloat16)
    b1t = jnp.tile(b1, W).reshape(1, W * C).astype(jnp.float32)
    b2t = jnp.tile(b2, W).reshape(1, W * C).astype(jnp.float32)

    out = basic_block_pallas(x, w1_big, b1t, w2_big, b2t)
    out = jax.block_until_ready(out)

    ref = basic_block_reference(x, w1, s1, b1, w2, s2, b2)
    assert out.shape == (N, C, H, W)
    err = float(jnp.max(jnp.abs(out - ref)))
    assert err < 3e-2, f"mismatch vs reference (max abs err {err})"

    print("KERNEL_OK")
</pallas_src>

<mosaic_0001>
module attributes {stable_mosaic.version = 11 : i64} {
  func.func @basic_block_kernel(%arg0: i32, %arg1: memref<1x16x128xbf16, #tpu.memory_space<vmem>>, %arg2: memref<128x384xbf16, #tpu.memory_space<vmem>>, %arg3: memref<128x384xbf16, #tpu.memory_space<vmem>>, %arg4: memref<1x128xf32, #tpu.memory_space<vmem>>, %arg5: memref<1x128xf32, #tpu.memory_space<vmem>>, %arg6: memref<1x16x128xf32, #tpu.memory_space<vmem>>) attributes {dimension_semantics = [#tpu.dimension_semantics<parallel>], iteration_bounds = array<i64: 2>, scalar_prefetch = 0 : i64, scratch_operands = 0 : i64, tpu.core_type = #tpu.core_type<tc>, window_params = [{transform_indices = @transform_0, window_bounds = array<i64: 1, 16, 128>}, {pipeline_mode = #tpu.pipeline_mode<synchronous>, transform_indices = @transform_1, window_bounds = array<i64: 128, 384>}, {pipeline_mode = #tpu.pipeline_mode<synchronous>, transform_indices = @transform_2, window_bounds = array<i64: 128, 384>}, {pipeline_mode = #tpu.pipeline_mode<synchronous>, transform_indices = @transform_3, window_bounds = array<i64: 1, 128>}, {pipeline_mode = #tpu.pipeline_mode<synchronous>, transform_indices = @transform_4, window_bounds = array<i64: 1, 128>}, {transform_indices = @transform_5, window_bounds = array<i64: 1, 16, 128>}]} {
    %c0 = arith.constant 0 : index
    %c0_0 = arith.constant 0 : index
    %c0_1 = arith.constant 0 : index
    %0 = vector.load %arg1[%c0, %c0_0, %c0_1] : memref<1x16x128xbf16, #tpu.memory_space<vmem>>, vector<1x16x128xbf16>
    %1 = vector.shape_cast %0 : vector<1x16x128xbf16> to vector<16x128xbf16>
    %2 = arith.extf %1 : vector<16x128xbf16> to vector<16x128xf32>
    %c0_2 = arith.constant 0 : index
    %c0_3 = arith.constant 0 : index
    %3 = vector.load %arg2[%c0_2, %c0_3] : memref<128x384xbf16, #tpu.memory_space<vmem>>, vector<128x384xbf16>
    %cst = arith.constant dense<0.000000e+00> : vector<16x384xf32>
    %4 = tpu.matmul %1, %3, %cst {dimension_numbers = #tpu.dot_dimension_numbers<[1], [0], [0], [1], [0, 0, 1, 1], [], []>} : vector<16x128xbf16>, vector<128x384xbf16>, vector<16x384xf32> -> vector<16x384xf32>
    %5 = vector.extract_strided_slice %4 {offsets = [0, 0], sizes = [16, 128], strides = [1, 1]} : vector<16x384xf32> to vector<16x128xf32>
    %6 = vector.extract_strided_slice %4 {offsets = [0, 128], sizes = [16, 128], strides = [1, 1]} : vector<16x384xf32> to vector<16x128xf32>
    %7 = vector.extract_strided_slice %4 {offsets = [0, 256], sizes = [16, 128], strides = [1, 1]} : vector<16x384xf32> to vector<16x128xf32>
    %cst_4 = arith.constant 0.000000e+00 : f32
    %8 = vector.broadcast %cst_4 : f32 to vector<1x128xf32>
    %9 = vector.extract_strided_slice %5 {offsets = [0, 0], sizes = [15, 128], strides = [1, 1]} : vector<16x128xf32> to vector<15x128xf32>
    %10 = tpu.concatenate %8, %9 in 0 : vector<1x128xf32>, vector<15x128xf32> -> vector<16x128xf32>
    %11 = arith.addf %10, %6 : vector<16x128xf32>
    %cst_5 = arith.constant 0.000000e+00 : f32
    %12 = vector.broadcast %cst_5 : f32 to vector<1x128xf32>
    %13 = vector.extract_strided_slice %7 {offsets = [1, 0], sizes = [15, 128], strides = [1, 1]} : vector<16x128xf32> to vector<15x128xf32>
    %14 = tpu.concatenate %13, %12 in 0 : vector<15x128xf32>, vector<1x128xf32> -> vector<16x128xf32>
    %15 = arith.addf %11, %14 : vector<16x128xf32>
    %c0_6 = arith.constant 0 : index
    %c0_7 = arith.constant 0 : index
    %16 = vector.load %arg4[%c0_6, %c0_7] : memref<1x128xf32, #tpu.memory_space<vmem>>, vector<1x128xf32>
    %17 = vector.broadcast %16 : vector<1x128xf32> to vector<16x128xf32>
    %18 = arith.addf %15, %17 : vector<16x128xf32>
    %cst_8 = arith.constant 0.000000e+00 : f32
    %19 = vector.broadcast %cst_8 : f32 to vector<16x128xf32>
    %20 = arith.maximumf %18, %19 : vector<16x128xf32>
    %21 = arith.truncf %20 : vector<16x128xf32> to vector<16x128xbf16>
    %c0_9 = arith.constant 0 : index
    %c0_10 = arith.constant 0 : index
    %22 = vector.load %arg3[%c0_9, %c0_10] : memref<128x384xbf16, #tpu.memory_space<vmem>>, vector<128x384xbf16>
    %cst_11 = arith.constant dense<0.000000e+00> : vector<16x384xf32>
    %23 = tpu.matmul %21, %22, %cst_11 {dimension_numbers = #tpu.dot_dimension_numbers<[1], [0], [0], [1], [0, 0, 1, 1], [], []>} : vector<16x128xbf16>, vector<128x384xbf16>, vector<16x384xf32> -> vector<16x384xf32>
    %24 = vector.extract_strided_slice %23 {offsets = [0, 0], sizes = [16, 128], strides = [1, 1]} : vector<16x384xf32> to vector<16x128xf32>
    %25 = vector.extract_strided_slice %23 {offsets = [0, 128], sizes = [16, 128], strides = [1, 1]} : vector<16x384xf32> to vector<16x128xf32>
    %26 = vector.extract_strided_slice %23 {offsets = [0, 256], sizes = [16, 128], strides = [1, 1]} : vector<16x384xf32> to vector<16x128xf32>
    %cst_12 = arith.constant 0.000000e+00 : f32
    %27 = vector.broadcast %cst_12 : f32 to vector<1x128xf32>
    %28 = vector.extract_strided_slice %24 {offsets = [0, 0], sizes = [15, 128], strides = [1, 1]} : vector<16x128xf32> to vector<15x128xf32>
    %29 = tpu.concatenate %27, %28 in 0 : vector<1x128xf32>, vector<15x128xf32> -> vector<16x128xf32>
    %30 = arith.addf %29, %25 : vector<16x128xf32>
    %cst_13 = arith.constant 0.000000e+00 : f32
    %31 = vector.broadcast %cst_13 : f32 to vector<1x128xf32>
    %32 = vector.extract_strided_slice %26 {offsets = [1, 0], sizes = [15, 128], strides = [1, 1]} : vector<16x128xf32> to vector<15x128xf32>
    %33 = tpu.concatenate %32, %31 in 0 : vector<15x128xf32>, vector<1x128xf32> -> vector<16x128xf32>
    %34 = arith.addf %30, %33 : vector<16x128xf32>
    %c0_14 = arith.constant 0 : index
    %c0_15 = arith.constant 0 : index
    %35 = vector.load %arg5[%c0_14, %c0_15] : memref<1x128xf32, #tpu.memory_space<vmem>>, vector<1x128xf32>
    %36 = vector.broadcast %35 : vector<1x128xf32> to vector<16x128xf32>
    %37 = arith.addf %34, %36 : vector<16x128xf32>
    %38 = arith.addf %37, %2 : vector<16x128xf32>
    %cst_16 = arith.constant 0.000000e+00 : f32
    %39 = vector.broadcast %cst_16 : f32 to vector<16x128xf32>
    %40 = arith.maximumf %38, %39 : vector<16x128xf32>
    %c0_17 = arith.constant 0 : index
    %c0_18 = arith.constant 0 : index
    %c0_19 = arith.constant 0 : index
    %41 = vector.load %arg6[%c0_17, %c0_18, %c0_19] : memref<1x16x128xf32, #tpu.memory_space<vmem>>, vector<1x16x128xf32>
    %42 = vector.shape_cast %41 : vector<1x16x128xf32> to vector<16x128xf32>
    %43 = vector.shape_cast %40 : vector<16x128xf32> to vector<1x16x128xf32>
    tpu.vector_store %arg6[%c0_17, %c0_18, %c0_19], %43 {strides = array<i32>} : memref<1x16x128xf32, #tpu.memory_space<vmem>>, vector<1x16x128xf32>,
    return
  }
  func.func @transform_0(%arg0: i32) -> (i32, i32, i32) {
    %c0_i32 = arith.constant 0 : i32
    %c0_i32_0 = arith.constant 0 : i32
    %c0_i32_1 = arith.constant 0 : i32
    return %arg0, %c0_i32, %c0_i32_0 : i32, i32, i32
  }
  func.func @transform_1(%arg0: i32) -> (i32, i32) {
    %c0_i32 = arith.constant 0 : i32
    %c0_i32_0 = arith.constant 0 : i32
    %c0_i32_1 = arith.constant 0 : i32
    return %c0_i32, %c0_i32_0 : i32, i32
  }
  func.func @transform_2(%arg0: i32) -> (i32, i32) {
    %c0_i32 = arith.constant 0 : i32
    %c0_i32_0 = arith.constant 0 : i32
    %c0_i32_1 = arith.constant 0 : i32
    return %c0_i32, %c0_i32_0 : i32, i32
  }
  func.func @transform_3(%arg0: i32) -> (i32, i32) {
    %c0_i32 = arith.constant 0 : i32
    %c0_i32_0 = arith.constant 0 : i32
    %c0_i32_1 = arith.constant 0 : i32
    return %c0_i32, %c0_i32_0 : i32, i32
  }
  func.func @transform_4(%arg0: i32) -> (i32, i32) {
    %c0_i32 = arith.constant 0 : i32
    %c0_i32_0 = arith.constant 0 : i32
    %c0_i32_1 = arith.constant 0 : i32
    return %c0_i32, %c0_i32_0 : i32, i32
  }
  func.func @transform_5(%arg0: i32) -> (i32, i32, i32) {
    %c0_i32 = arith.constant 0 : i32
    %c0_i32_0 = arith.constant 0 : i32
    %c0_i32_1 = arith.constant 0 : i32
    return %arg0, %c0_i32, %c0_i32_0 : i32, i32, i32
  }
}

</mosaic_0001>

<llo_original>
// kernel: basic_block_pallas.1
$region0: #{basic_block_pallas.1}
  #allocation0 [shape = 'u32[]', space=smem, size = 0x4, offset = 0x4, fixed_abs, tag = 'smem constant byte address 0x4 - core index']
  #allocation1 [shape = 'u32[144,128]{1,0:T(1,128)}', space=vmem, size = 0x12000, scoped, tag = 'internal scratch']
  %s0 = inlined_call_operand.vmem [shape: bf16[2,16,128], index: 0, kind: input, shape index: {}]
  %s1 = inlined_call_operand.vmem [shape: bf16[128,384], index: 1, kind: input, shape index: {}]
  %s2 = inlined_call_operand.vmem [shape: bf16[128,384], index: 2, kind: input, shape index: {}]
  %s3 = inlined_call_operand.vmem [shape: f32[1,128], index: 3, kind: input, shape index: {}]
  %s4 = inlined_call_operand.vmem [shape: f32[1,128], index: 4, kind: input, shape index: {}]
  %s5 = inlined_call_operand.vmem [shape: f32[2,16,128], index: 5, kind: output, shape index: {}]
  %s6 = sld [smem:[#allocation0]]
  $region53: #{basic_block_pallas.1} parent=0
    _
  %s8 = ssub.s32 1, %s6
  %s9 = scalar_select 0, %s8, %s6
  loop: start=0, step=1, limit=4
  $region2: #{basic_block_pallas.1} parent=0 // loop_pre_header
    _
  $region3: #{basic_block_pallas.1} parent=0 // loop_header
    %s11 = sphi 0, %s15
    %p12 = scmp.ge.s32.totalorder %s11, 4
    %s21 = sphi 0, %s23
    %s24 = sphi 0, %s21
    %s25 = sphi 0, %s24
    %s41 = sphi 0, %s25
    %s45 = sphi 0, %s45
    %s47 = sphi 0, %s45
    %s48 = sphi 0, %s47
    %s62 = sphi 0, %s48
    %s66 = sphi 0, %s66
    %s68 = sphi 0, %s66
    %s69 = sphi 0, %s68
    %s83 = sphi 0, %s69
    %s87 = sphi 0, %s87
    %s89 = sphi 0, %s87
    %s90 = sphi 0, %s89
    %s104 = sphi 0, %s90
    %s108 = sphi 0, %s108
    %s110 = sphi 0, %s108
    %s111 = sphi 0, %s110
    %s125 = sphi 0, %s111
    %s131 = sphi 0, %s133
    %s134 = sphi 0, %s131
    %s135 = sphi 0, %s134
    %s151 = sphi 0, %s135
  $region4: #{basic_block_pallas.1} parent=0 // loop_header_branch
    %14 = sbr.rel (%p12) target = $region8
  $region5: #{basic_block_pallas.1} parent=0 // loop_body
    %s16 = ssub.s32 %s11, 1
    %s17 = ssub.s32 %s11, 2
    %s18 = sadd.s32 %s11, 1
    %s19 = ssub.s32 %s11, %s18
    %p20 = scmp.eq.s32.totalorder %s19, 0
    %s22 = sadd.s32 %s21, 1
    %s23 = scalar_select %p20, %s21, %s22
    %p26 = pneg %p20
    %p27 = scmp.eq.s32.totalorder %s11, 1
    %p28 = por %p26, %p27
    %p29 = scmp.ne.s32.totalorder %s21, %s24
    %p30 = scmp.eq.s32.totalorder %s11, 0
    %p31 = por %p29, %p30
    %p32 = scmp.ne.s32.totalorder %s21, %s24
    %p33 = scmp.eq.s32.totalorder %s16, 1
    %p34 = por %p32, %p33
    %p35 = scmp.ne.s32.totalorder %s24, %s25
    %p36 = scmp.eq.s32.totalorder %s16, 0
    %p37 = por %p35, %p36
    %p38 = scmp.ne.s32.totalorder %s24, %s25
    %p39 = scmp.eq.s32.totalorder %s17, 1
    %p40 = por %p38, %p39
    %p42 = scmp.ne.s32.totalorder %s25, %s41
    %p43 = scmp.eq.s32.totalorder %s17, 0
    %p44 = por %p42, %p43
    %s46 = sadd.s32 %s45, 1
    %p49 = scmp.eq.s32.totalorder %s11, 1
    %p50 = scmp.ne.s32.totalorder %s45, %s47
    %p51 = scmp.eq.s32.totalorder %s11, 0
    %p52 = por %p50, %p51
    %p53 = scmp.ne.s32.totalorder %s45, %s47
    %p54 = scmp.eq.s32.totalorder %s16, 1
    %p55 = por %p53, %p54
    %p56 = scmp.ne.s32.totalorder %s47, %s48
    %p57 = scmp.eq.s32.totalorder %s16, 0
    %p58 = por %p56, %p57
    %p59 = scmp.ne.s32.totalorder %s47, %s48
    %p60 = scmp.eq.s32.totalorder %s17, 1
    %p61 = por %p59, %p60
    %p63 = scmp.ne.s32.totalorder %s48, %s62
    %p64 = scmp.eq.s32.totalorder %s17, 0
    %p65 = por %p63, %p64
    %s67 = sadd.s32 %s66, 1
    %p70 = scmp.eq.s32.totalorder %s11, 1
    %p71 = scmp.ne.s32.totalorder %s66, %s68
    %p72 = scmp.eq.s32.totalorder %s11, 0
    %p73 = por %p71, %p72
    %p74 = scmp.ne.s32.totalorder %s66, %s68
    %p75 = scmp.eq.s32.totalorder %s16, 1
    %p76 = por %p74, %p75
    %p77 = scmp.ne.s32.totalorder %s68, %s69
    %p78 = scmp.eq.s32.totalorder %s16, 0
    %p79 = por %p77, %p78
    %p80 = scmp.ne.s32.totalorder %s68, %s69
    %p81 = scmp.eq.s32.totalorder %s17, 1
    %p82 = por %p80, %p81
    %p84 = scmp.ne.s32.totalorder %s69, %s83
    %p85 = scmp.eq.s32.totalorder %s17, 0
    %p86 = por %p84, %p85
    %s88 = sadd.s32 %s87, 1
    %p91 = scmp.eq.s32.totalorder %s11, 1
    %p92 = scmp.ne.s32.totalorder %s87, %s89
    %p93 = scmp.eq.s32.totalorder %s11, 0
    %p94 = por %p92, %p93
    %p95 = scmp.ne.s32.totalorder %s87, %s89
    %p96 = scmp.eq.s32.totalorder %s16, 1
    %p97 = por %p95, %p96
    %p98 = scmp.ne.s32.totalorder %s89, %s90
    %p99 = scmp.eq.s32.totalorder %s16, 0
    %p100 = por %p98, %p99
    %p101 = scmp.ne.s32.totalorder %s89, %s90
    %p102 = scmp.eq.s32.totalorder %s17, 1
    %p103 = por %p101, %p102
    %p105 = scmp.ne.s32.totalorder %s90, %s104
    %p106 = scmp.eq.s32.totalorder %s17, 0
    %p107 = por %p105, %p106
    %s109 = sadd.s32 %s108, 1
    %p112 = scmp.eq.s32.totalorder %s11, 1
    %p113 = scmp.ne.s32.totalorder %s108, %s110
    %p114 = scmp.eq.s32.totalorder %s11, 0
    %p115 = por %p113, %p114
    %p116 = scmp.ne.s32.totalorder %s108, %s110
    %p117 = scmp.eq.s32.totalorder %s16, 1
    %p118 = por %p116, %p117
    %p119 = scmp.ne.s32.totalorder %s110, %s111
    %p120 = scmp.eq.s32.totalorder %s16, 0
    %p121 = por %p119, %p120
    %p122 = scmp.ne.s32.totalorder %s110, %s111
    %p123 = scmp.eq.s32.totalorder %s17, 1
    %p124 = por %p122, %p123
    %p126 = scmp.ne.s32.totalorder %s111, %s125
    %p127 = scmp.eq.s32.totalorder %s17, 0
    %p128 = por %p126, %p127
    %s129 = ssub.s32 %s11, %s18
    %p130 = scmp.eq.s32.totalorder %s129, 0
    %s132 = sadd.s32 %s131, 1
    %s133 = scalar_select %p130, %s131, %s132
    %p136 = pneg %p130
    %p137 = scmp.eq.s32.totalorder %s11, 1
    %p138 = por %p136, %p137
    %p139 = scmp.ne.s32.totalorder %s131, %s134
    %p140 = scmp.eq.s32.totalorder %s11, 0
    %p141 = por %p139, %p140
    %p142 = scmp.ne.s32.totalorder %s131, %s134
    %p143 = scmp.eq.s32.totalorder %s16, 1
    %p144 = por %p142, %p143
    %p145 = scmp.ne.s32.totalorder %s134, %s135
    %p146 = scmp.eq.s32.totalorder %s16, 0
    %p147 = por %p145, %p146
    %p148 = scmp.ne.s32.totalorder %s134, %s135
    %p149 = scmp.eq.s32.totalorder %s17, 1
    %p150 = por %p148, %p149
    %p152 = scmp.ne.s32.totalorder %s135, %s151
    %p153 = scmp.eq.s32.totalorder %s17, 0
    %p154 = por %p152, %p153
    %p155 = scmp.le.s32.totalorder 1, %s11
    %p156 = scmp.lt.s32.totalorder %s11, 3
    %p157 = pnand %p155, %p156
    %p158 = pneg %p157
    // Predicated region
    $region9: #{basic_block_pallas.1} parent=5 // pred_check
      _
    $region10: #{basic_block_pallas.1} parent=5 // pred_check_branch
      %160 = sbr.rel (%p157) target = $region12
    $region11: #{basic_block_pallas.1} parent=5 // pred_region
      %s161 = ssub.s32 %s11, 1
      // Predicated region
      $region13: #{basic_block_pallas.1} parent=11 // pred_check
        %p162 = pneg %p58
      $region14: #{basic_block_pallas.1} parent=11 // pred_check_branch
        %164 = sbr.rel (%p162) target = $region16
      $region15: #{basic_block_pallas.1} parent=11 // pred_region
        _
      $region16: #{basic_block_pallas.1} parent=11 // pred_fallthru
        _
      // Predicated region
      $region17: #{basic_block_pallas.1} parent=11 // pred_check
        %p165 = pneg %p79
      $region18: #{basic_block_pallas.1} parent=11 // pred_check_branch
        %167 = sbr.rel (%p165) target = $region20
      $region19: #{basic_block_pallas.1} parent=11 // pred_region
        _
      $region20: #{basic_block_pallas.1} parent=11 // pred_fallthru
        _
      // Predicated region
      $region21: #{basic_block_pallas.1} parent=11 // pred_check
        %p168 = pneg %p100
      $region22: #{basic_block_pallas.1} parent=11 // pred_check_branch
        %170 = sbr.rel (%p168) target = $region24
      $region23: #{basic_block_pallas.1} parent=11 // pred_region
        _
      $region24: #{basic_block_pallas.1} parent=11 // pred_fallthru
        _
      // Predicated region
      $region25: #{basic_block_pallas.1} parent=11 // pred_check
        %p171 = pneg %p121
      $region26: #{basic_block_pallas.1} parent=11 // pred_check_branch
        %173 = sbr.rel (%p171) target = $region28
      $region27: #{basic_block_pallas.1} parent=11 // pred_region
        _
      $region28: #{basic_block_pallas.1} parent=11 // pred_fallthru
        _
    $region12: #{basic_block_pallas.1} parent=5 // pred_fallthru
      _
    %p174 = scmp.lt.s32.totalorder %s11, 2
    // Predicated region
    $region29: #{basic_block_pallas.1} parent=5 // pred_check
      %p175 = pneg %p174
    $region30: #{basic_block_pallas.1} parent=5 // pred_check_branch
      %177 = sbr.rel (%p175) target = $region32
    $region31: #{basic_block_pallas.1} parent=5 // pred_region
      // Predicated region
      $region33: #{basic_block_pallas.1} parent=31 // pred_check
        %p178 = pneg %p31
      $region34: #{basic_block_pallas.1} parent=31 // pred_check_branch
        %180 = sbr.rel (%p178) target = $region36
      $region35: #{basic_block_pallas.1} parent=31 // pred_region
        %p181 = scmp.lt.s32.totalorder %s11, 1
        %s182 = scalar_select %p181, %s11, 1
        %s183 = smul.addr %s182, 2
        %s184 = smul.addr %s183, 4
        %s185 = scalar_lea.vmem %s0, %s184
      $region36: #{basic_block_pallas.1} parent=31 // pred_fallthru
        _
    $region32: #{basic_block_pallas.1} parent=5 // pred_fallthru
      _
    %p186 = scmp.le.s32.totalorder 1, %s11
    %p187 = scmp.lt.s32.totalorder %s11, 3
    %p188 = pnand %p186, %p187
    %p189 = pneg %p188
    // Predicated region
    $region37: #{basic_block_pallas.1} parent=5 // pred_check
      _
    $region38: #{basic_block_pallas.1} parent=5 // pred_check_branch
      %191 = sbr.rel (%p188) target = $region40
    $region39: #{basic_block_pallas.1} parent=5 // pred_region
      %s192 = ssub.s32 %s11, 1
      %p193 = scmp.lt.s32.totalorder %s16, 1
      %s194 = scalar_select %p193, %s16, 1
      %s195 = smul.addr %s194, 2
      %s196 = smul.addr %s195, 4
      %s197 = scalar_lea.vmem %s0, %s196
      %p198 = pneg %p37
      %p199 = pneg %p34
      %p200 = pneg %p58
      %p201 = pneg %p55
      %p202 = pneg %p79
      %p203 = pneg %p76
      %p204 = pneg %p100
      %p205 = pneg %p97
      %p206 = pneg %p121
      %p207 = pneg %p118
      %p208 = pneg %p147
      %p209 = pneg %p144
      %p210 = scmp.lt.s32.totalorder %s16, 1
      %s211 = scalar_select %p210, %s16, 1
      %s212 = smul.addr %s211, 2
      %s213 = smul.addr %s212, 8
      %s214 = scalar_lea.vmem %s5, %s213
      %p215 = scmp.lt.s32.totalorder %s16, 1
      %s216 = scalar_select %p215, %s16, 1
      %s217 = smul.addr %s216, 2
      %s218 = smul.addr %s217, 4
      %s219 = scalar_lea.vmem %s0, %s218
      %p220 = scmp.lt.s32.totalorder %s16, 1
      %s221 = scalar_select %p220, %s16, 1
      %s222 = smul.addr %s221, 2
      %s223 = smul.addr %s222, 8
      %s224 = scalar_lea.vmem %s5, %s223
      %v226 = vld [vmem:[%s219] sm:$0xf]
      %v227 = vld [vmem:[%s219 + $0x4] sm:$0xf]
      %v228 = vunpack.c.l.bf16 %v226
      %v229 = vunpack.c.l.bf16 %v227
      %v230 = vld [vmem:[%s1] sm:$0xff]
      %v231 = vld [vmem:[%s1 + $0x8] sm:$0xf]
      %v232 = vld [vmem:[%s1 + $0xc] sm:$0xff]
      %v233 = vld [vmem:[%s1 + $0x14] sm:$0xf]
      %v234 = vld [vmem:[%s1 + $0x18] sm:$0xff]
      %v235 = vld [vmem:[%s1 + $0x20] sm:$0xf]
      %v236 = vld [vmem:[%s1 + $0x24] sm:$0xff]
      %v237 = vld [vmem:[%s1 + $0x2c] sm:$0xf]
      %v238 = vld [vmem:[%s1 + $0x30] sm:$0xff]
      %v239 = vld [vmem:[%s1 + $0x38] sm:$0xf]
      %v240 = vld [vmem:[%s1 + $0x3c] sm:$0xff]
      %v241 = vld [vmem:[%s1 + $0x44] sm:$0xf]
      %v242 = vld [vmem:[%s1 + $0x48] sm:$0xff]
      %v243 = vld [vmem:[%s1 + $0x50] sm:$0xf]
      %v244 = vld [vmem:[%s1 + $0x54] sm:$0xff]
      %v245 = vld [vmem:[%s1 + $0x5c] sm:$0xf]
      %v246 = vld [vmem:[%s1 + $0x60] sm:$0xff]
      %v247 = vld [vmem:[%s1 + $0x68] sm:$0xf]
      %v248 = vld [vmem:[%s1 + $0x6c] sm:$0xff]
      %v249 = vld [vmem:[%s1 + $0x74] sm:$0xf]
      %v250 = vld [vmem:[%s1 + $0x78] sm:$0xff]
      %v251 = vld [vmem:[%s1 + $0x80] sm:$0xf]
      %v252 = vld [vmem:[%s1 + $0x84] sm:$0xff]
      %v253 = vld [vmem:[%s1 + $0x8c] sm:$0xf]
      %v254 = vld [vmem:[%s1 + $0x90] sm:$0xff]
      %v255 = vld [vmem:[%s1 + $0x98] sm:$0xf]
      %v256 = vld [vmem:[%s1 + $0x9c] sm:$0xff]
      %v257 = vld [vmem:[%s1 + $0xa4] sm:$0xf]
      %v258 = vld [vmem:[%s1 + $0xa8] sm:$0xff]
      %v259 = vld [vmem:[%s1 + $0xb0] sm:$0xf]
      %v260 = vld [vmem:[%s1 + $0xb4] sm:$0xff]
      %v261 = vld [vmem:[%s1 + $0xbc] sm:$0xf]
      %v264 = vunpack.c.l.b16 %v226
      %v265 = vunpack.c.l.b16 %v227
      %v266 = vpack.c.b16 %v265, %v264
      %v300 = vunpack.c.l.b16 %v230
      %v301 = vunpack.c.h.b16 %v230
      %v302 = vunpack.c.l.b16 %v231
      %v303 = vunpack.c.l.b16 %v232
      %v304 = vunpack.c.h.b16 %v232
      %v305 = vunpack.c.l.b16 %v233
      %v306 = vunpack.c.l.b16 %v234
      %v307 = vunpack.c.h.b16 %v234
      %v308 = vunpack.c.l.b16 %v235
      %v309 = vunpack.c.l.b16 %v236
      %v310 = vunpack.c.h.b16 %v236
      %v311 = vunpack.c.l.b16 %v237
      %v312 = vunpack.c.l.b16 %v238
      %v313 = vunpack.c.h.b16 %v238
      %v314 = vunpack.c.l.b16 %v239
      %v315 = vunpack.c.l.b16 %v240
      %v316 = vunpack.c.h.b16 %v240
      %v317 = vunpack.c.l.b16 %v241
      %v318 = vunpack.c.l.b16 %v242
      %v319 = vunpack.c.h.b16 %v242
      %v320 = vunpack.c.l.b16 %v243
      %v321 = vunpack.c.l.b16 %v244
      %v322 = vunpack.c.h.b16 %v244
      %v323 = vunpack.c.l.b16 %v245
      %v324 = vunpack.c.l.b16 %v246
      %v325 = vunpack.c.h.b16 %v246
      %v326 = vunpack.c.l.b16 %v247
      %v327 = vunpack.c.l.b16 %v248
      %v328 = vunpack.c.h.b16 %v248
      %v329 = vunpack.c.l.b16 %v249
      %v330 = vunpack.c.l.b16 %v250
      %v331 = vunpack.c.h.b16 %v250
      %v332 = vunpack.c.l.b16 %v251
      %v333 = vunpack.c.l.b16 %v252
      %v334 = vunpack.c.h.b16 %v252
      %v335 = vunpack.c.l.b16 %v253
      %v336 = vunpack.c.l.b16 %v254
      %v337 = vunpack.c.h.b16 %v254
      %v338 = vunpack.c.l.b16 %v255
      %v339 = vunpack.c.l.b16 %v256
      %v340 = vunpack.c.h.b16 %v256
      %v341 = vunpack.c.l.b16 %v257
      %v342 = vunpack.c.l.b16 %v258
      %v343 = vunpack.c.h.b16 %v258
      %v344 = vunpack.c.l.b16 %v259
      %v345 = vunpack.c.l.b16 %v260
      %v346 = vunpack.c.h.b16 %v260
      %v347 = vunpack.c.l.b16 %v261
      %v348 = vpack.c.b16 %v303, %v300
      %v349 = vpack.c.b16 %v304, %v301
      %v350 = vpack.c.b16 %v305, %v302
      %v351 = vpack.c.b16 %v309, %v306
      %v352 = vpack.c.b16 %v310, %v307
      %v353 = vpack.c.b16 %v311, %v308
      %v354 = vpack.c.b16 %v315, %v312
      %v355 = vpack.c.b16 %v316, %v313
      %v356 = vpack.c.b16 %v317, %v314
      %v357 = vpack.c.b16 %v321, %v318
      %v358 = vpack.c.b16 %v322, %v319
      %v359 = vpack.c.b16 %v323, %v320
      %v360 = vpack.c.b16 %v327, %v324
      %v361 = vpack.c.b16 %v328, %v325
      %v362 = vpack.c.b16 %v329, %v326
      %v363 = vpack.c.b16 %v333, %v330
      %v364 = vpack.c.b16 %v334, %v331
      %v365 = vpack.c.b16 %v335, %v332
      %v366 = vpack.c.b16 %v339, %v336
      %v367 = vpack.c.b16 %v340, %v337
      %v368 = vpack.c.b16 %v341, %v338
      %v369 = vpack.c.b16 %v345, %v342
      %v370 = vpack.c.b16 %v346, %v343
      %v371 = vpack.c.b16 %v347, %v344
      %396 = vmatprep.subr.bf16.mxu0 %v349
      %397 = vmatpush1.bf16.msra.mxu0 %v348
      %398 = vmatprep.subr.bf16.mxu0 %v352
      %399 = vmatpush1.bf16.msra.mxu0 %v351
      %400 = vmatprep.subr.bf16.mxu0 %v355
      %401 = vmatpush1.bf16.msra.mxu0 %v354
      %402 = vmatprep.subr.bf16.mxu0 %v358
      %403 = vmatpush1.bf16.msra.mxu0 %v357
      %404 = vmatprep.subr.bf16.mxu0 %v361
      %405 = vmatpush1.bf16.msra.mxu0 %v360
      %406 = vmatprep.subr.bf16.mxu0 %v364
      %407 = vmatpush1.bf16.msra.mxu0 %v363
      %408 = vmatprep.subr.bf16.mxu0 %v367
      %409 = vmatpush1.bf16.msra.mxu0 %v366
      %410 = vmatprep.subr.bf16.mxu0 %v370
      %411 = vmatpush1.bf16.msra.mxu0 %v369
      %412 = vmatprep.subr.bf16.mxu0 0
      %413 = vmatpush1.bf16.msra.mxu0 0
      %414 = vmatprep.subr.bf16.mxu0 0
      %415 = vmatpush1.bf16.msra.mxu0 0
      %416 = vmatprep.subr.bf16.mxu0 0
      %417 = vmatpush1.bf16.msra.mxu0 0
      %418 = vmatprep.subr.bf16.mxu0 0
      %419 = vmatpush1.bf16.msra.mxu0 0
      %420 = vmatprep.subr.bf16.mxu0 0
      %421 = vmatpush1.bf16.msra.mxu0 0
      %422 = vmatprep.subr.bf16.mxu0 0
      %423 = vmatpush1.bf16.msra.mxu0 0
      %424 = vmatprep.subr.bf16.mxu0 0
      %425 = vmatpush1.bf16.msra.mxu0 0
      %426 = vmatprep.subr.bf16.mxu0 0
      %427 = vmatpush1.bf16.msra.mxu0 0
      %428 = vmatprep.mubr.bf16.mxu0 0
      %429 = vmatmul.mubr.bf16.gmra.mrb[0].mxu0 %v266
      %v430 = vpop.f32.mrb[0].mxu0
      %v431 = vadd.f32 0.0, %v430
      %v432 = vpop.f32.mrb[0].mxu0
      %v433 = vadd.f32 0.0, %v432
      %v434 = vpop.f32.mrb[0].mxu0
      %v435 = vadd.f32 0.0, %v434
      %v436 = vpop.f32.mrb[0].mxu0
      %v437 = vadd.f32 0.0, %v436
      %438 = vdwg.mxu0
      %439 = vmatprep.subr.bf16.mxu0 0
      %440 = vmatpush1.bf16.msra.mxu0 %v350
      %441 = vmatprep.subr.bf16.mxu0 0
      %442 = vmatpush1.bf16.msra.mxu0 %v353
      %443 = vmatprep.subr.bf16.mxu0 0
      %444 = vmatpush1.bf16.msra.mxu0 %v356
      %445 = vmatprep.subr.bf16.mxu0 0
      %446 = vmatpush1.bf16.msra.mxu0 %v359
      %447 = vmatprep.subr.bf16.mxu0 0
      %448 = vmatpush1.bf16.msra.mxu0 %v362
      %449 = vmatprep.subr.bf16.mxu0 0
      %450 = vmatpush1.bf16.msra.mxu0 %v365
      %451 = vmatprep.subr.bf16.mxu0 0
      %452 = vmatpush1.bf16.msra.mxu0 %v368
      %453 = vmatprep.subr.bf16.mxu0 0
      %454 = vmatpush1.bf16.msra.mxu0 %v371
      %455 = vmatprep.subr.bf16.mxu0 0
      %456 = vmatpush1.bf16.msra.mxu0 0
      %457 = vmatprep.subr.bf16.mxu0 0
      %458 = vmatpush1.bf16.msra.mxu0 0
      %459 = vmatprep.subr.bf16.mxu0 0
      %460 = vmatpush1.bf16.msra.mxu0 0
      %461 = vmatprep.subr.bf16.mxu0 0
      %462 = vmatpush1.bf16.msra.mxu0 0
      %463 = vmatprep.subr.bf16.mxu0 0
      %464 = vmatpush1.bf16.msra.mxu0 0
      %465 = vmatprep.subr.bf16.mxu0 0
      %466 = vmatpush1.bf16.msra.mxu0 0
      %467 = vmatprep.subr.bf16.mxu0 0
      %468 = vmatpush1.bf16.msra.mxu0 0
      %469 = vmatprep.subr.bf16.mxu0 0
      %470 = vmatpush1.bf16.msra.mxu0 0
      %471 = vmatprep.mubr.bf16.mxu0 0
      %472 = vmatmul.mubr.bf16.gmra.mrb[0].mxu0 %v266
      %v473 = vpop.f32.mrb[0].mxu0
      %v474 = vadd.f32 0.0, %v473
      %v475 = vpop.f32.mrb[0].mxu0
      %v476 = vpop.f32.mrb[0].mxu0
      %v477 = vadd.f32 0.0, %v476
      %v478 = vpop.f32.mrb[0].mxu0
      %479 = vdwg.mxu0
      %vm482 = vcmask 1040384
      %v483 = vrot.slane %v431, 7
      %v484 = vrot.slane %v435, 7
      %v485 = vsel %vm482, %v483, %v484
      %v488 = vsel %vm482, 0.0, %v483
      %v489 = vadd.f32 %v488, %v433
      %v490 = vadd.f32 %v485, %v437
      %vm493 = vcmask 1046528
      %v494 = vrot.slane %v474, 1
      %v495 = vrot.slane %v477, 1
      %v496 = vsel %vm493, %v494, %v495
      %v499 = vsel %vm493, %v495, 0.0
      %v500 = vadd.f32 %v489, %v496
      %v501 = vadd.f32 %v490, %v499
      %v502 = vld [vmem:[%s3] sm:$0x1]
      %v504 = vlaneseq
      %v505 = vshrl.u32 %v504, 7
      %v506 = vsub.s32 0, %v505
      %v507 = vrot.slane %v502, %v506
      %v509 = vadd.f32 %v500, %v507
      %v510 = vadd.f32 %v501, %v507
      %v511 = vmax.f32 %v509, 0.0
      %v512 = vmax.f32 %v510, 0.0
      %v513 = vpack.c.bf16 %v512, %v511
      %v514 = vld [vmem:[%s2] sm:$0xff]
      %v515 = vld [vmem:[%s2 + $0x8] sm:$0xf]
      %v516 = vld [vmem:[%s2 + $0xc] sm:$0xff]
      %v517 = vld [vmem:[%s2 + $0x14] sm:$0xf]
      %v518 = vld [vmem:[%s2 + $0x18] sm:$0xff]
      %v519 = vld [vmem:[%s2 + $0x20] sm:$0xf]
      %v520 = vld [vmem:[%s2 + $0x24] sm:$0xff]
      %v521 = vld [vmem:[%s2 + $0x2c] sm:$0xf]
      %v522 = vld [vmem:[%s2 + $0x30] sm:$0xff]
      %v523 = vld [vmem:[%s2 + $0x38] sm:$0xf]
      %v524 = vld [vmem:[%s2 + $0x3c] sm:$0xff]
      %v525 = vld [vmem:[%s2 + $0x44] sm:$0xf]
      %v526 = vld [vmem:[%s2 + $0x48] sm:$0xff]
      %v527 = vld [vmem:[%s2 + $0x50] sm:$0xf]
      %v528 = vld [vmem:[%s2 + $0x54] sm:$0xff]
      %v529 = vld [vmem:[%s2 + $0x5c] sm:$0xf]
      %v530 = vld [vmem:[%s2 + $0x60] sm:$0xff]
      %v531 = vld [vmem:[%s2 + $0x68] sm:$0xf]
      %v532 = vld [vmem:[%s2 + $0x6c] sm:$0xff]
      %v533 = vld [vmem:[%s2 + $0x74] sm:$0xf]
      %v534 = vld [vmem:[%s2 + $0x78] sm:$0xff]
      %v535 = vld [vmem:[%s2 + $0x80] sm:$0xf]
      %v536 = vld [vmem:[%s2 + $0x84] sm:$0xff]
      %v537 = vld [vmem:[%s2 + $0x8c] sm:$0xf]
      %v538 = vld [vmem:[%s2 + $0x90] sm:$0xff]
      %v539 = vld [vmem:[%s2 + $0x98] sm:$0xf]
      %v540 = vld [vmem:[%s2 + $0x9c] sm:$0xff]
      %v541 = vld [vmem:[%s2 + $0xa4] sm:$0xf]
      %v542 = vld [vmem:[%s2 + $0xa8] sm:$0xff]
      %v543 = vld [vmem:[%s2 + $0xb0] sm:$0xf]
      %v544 = vld [vmem:[%s2 + $0xb4] sm:$0xff]
      %v545 = vld [vmem:[%s2 + $0xbc] sm:$0xf]
      %v578 = vunpack.c.l.b16 %v514
      %v579 = vunpack.c.h.b16 %v514
      %v580 = vunpack.c.l.b16 %v515
      %v581 = vunpack.c.l.b16 %v516
      %v582 = vunpack.c.h.b16 %v516
      %v583 = vunpack.c.l.b16 %v517
      %v584 = vunpack.c.l.b16 %v518
      %v585 = vunpack.c.h.b16 %v518
      %v586 = vunpack.c.l.b16 %v519
      %v587 = vunpack.c.l.b16 %v520
      %v588 = vunpack.c.h.b16 %v520
      %v589 = vunpack.c.l.b16 %v521
      %v590 = vunpack.c.l.b16 %v522
      %v591 = vunpack.c.h.b16 %v522
      %v592 = vunpack.c.l.b16 %v523
      %v593 = vunpack.c.l.b16 %v524
      %v594 = vunpack.c.h.b16 %v524
      %v595 = vunpack.c.l.b16 %v525
      %v596 = vunpack.c.l.b16 %v526
      %v597 = vunpack.c.h.b16 %v526
      %v598 = vunpack.c.l.b16 %v527
      %v599 = vunpack.c.l.b16 %v528
      %v600 = vunpack.c.h.b16 %v528
      %v601 = vunpack.c.l.b16 %v529
      %v602 = vunpack.c.l.b16 %v530
      %v603 = vunpack.c.h.b16 %v530
      %v604 = vunpack.c.l.b16 %v531
      %v605 = vunpack.c.l.b16 %v532
      %v606 = vunpack.c.h.b16 %v532
      %v607 = vunpack.c.l.b16 %v533
      %v608 = vunpack.c.l.b16 %v534
      %v609 = vunpack.c.h.b16 %v534
      %v610 = vunpack.c.l.b16 %v535
      %v611 = vunpack.c.l.b16 %v536
      %v612 = vunpack.c.h.b16 %v536
      %v613 = vunpack.c.l.b16 %v537
      %v614 = vunpack.c.l.b16 %v538
      %v615 = vunpack.c.h.b16 %v538
      %v616 = vunpack.c.l.b16 %v539
      %v617 = vunpack.c.l.b16 %v540
      %v618 = vunpack.c.h.b16 %v540
      %v619 = vunpack.c.l.b16 %v541
      %v620 = vunpack.c.l.b16 %v542
      %v621 = vunpack.c.h.b16 %v542
      %v622 = vunpack.c.l.b16 %v543
      %v623 = vunpack.c.l.b16 %v544
      %v624 = vunpack.c.h.b16 %v544
      %v625 = vunpack.c.l.b16 %v545
      %v626 = vpack.c.b16 %v581, %v578
      %v627 = vpack.c.b16 %v582, %v579
      %v628 = vpack.c.b16 %v583, %v580
      %v629 = vpack.c.b16 %v587, %v584
      %v630 = vpack.c.b16 %v588, %v585
      %v631 = vpack.c.b16 %v589, %v586
      %v632 = vpack.c.b16 %v593, %v590
      %v633 = vpack.c.b16 %v594, %v591
      %v634 = vpack.c.b16 %v595, %v592
      %v635 = vpack.c.b16 %v599, %v596
      %v636 = vpack.c.b16 %v600, %v597
      %v637 = vpack.c.b16 %v601, %v598
      %v638 = vpack.c.b16 %v605, %v602
      %v639 = vpack.c.b16 %v606, %v603
      %v640 = vpack.c.b16 %v607, %v604
      %v641 = vpack.c.b16 %v611, %v608
      %v642 = vpack.c.b16 %v612, %v609
      %v643 = vpack.c.b16 %v613, %v610
      %v644 = vpack.c.b16 %v617, %v614
      %v645 = vpack.c.b16 %v618, %v615
      %v646 = vpack.c.b16 %v619, %v616
      %v647 = vpack.c.b16 %v623, %v620
      %v648 = vpack.c.b16 %v624, %v621
      %v649 = vpack.c.b16 %v625, %v622
      %674 = vmatprep.subr.bf16.mxu0 %v627
      %675 = vmatpush1.bf16.msra.mxu0 %v626
      %676 = vmatprep.subr.bf16.mxu0 %v630
      %677 = vmatpush1.bf16.msra.mxu0 %v629
      %678 = vmatprep.subr.bf16.mxu0 %v633
      %679 = vmatpush1.bf16.msra.mxu0 %v632
      %680 = vmatprep.subr.bf16.mxu0 %v636
      %681 = vmatpush1.bf16.msra.mxu0 %v635
      %682 = vmatprep.subr.bf16.mxu0 %v639
      %683 = vmatpush1.bf16.msra.mxu0 %v638
      %684 = vmatprep.subr.bf16.mxu0 %v642
      %685 = vmatpush1.bf16.msra.mxu0 %v641
      %686 = vmatprep.subr.bf16.mxu0 %v645
      %687 = vmatpush1.bf16.msra.mxu0 %v644
      %688 = vmatprep.subr.bf16.mxu0 %v648
      %689 = vmatpush1.bf16.msra.mxu0 %v647
      %690 = vmatprep.subr.bf16.mxu0 0
      %691 = vmatpush1.bf16.msra.mxu0 0
      %692 = vmatprep.subr.bf16.mxu0 0
      %693 = vmatpush1.bf16.msra.mxu0 0
      %694 = vmatprep.subr.bf16.mxu0 0
      %695 = vmatpush1.bf16.msra.mxu0 0
      %696 = vmatprep.subr.bf16.mxu0 0
      %697 = vmatpush1.bf16.msra.mxu0 0
      %698 = vmatprep.subr.bf16.mxu0 0
      %699 = vmatpush1.bf16.msra.mxu0 0
      %700 = vmatprep.subr.bf16.mxu0 0
      %701 = vmatpush1.bf16.msra.mxu0 0
      %702 = vmatprep.subr.bf16.mxu0 0
      %703 = vmatpush1.bf16.msra.mxu0 0
      %704 = vmatprep.subr.bf16.mxu0 0
      %705 = vmatpush1.bf16.msra.mxu0 0
      %706 = vmatprep.mubr.bf16.mxu0 0
      %707 = vmatmul.mubr.bf16.gmra.mrb[0].mxu0 %v513
      %v708 = vpop.f32.mrb[0].mxu0
      %v709 = vadd.f32 0.0, %v708
      %v710 = vpop.f32.mrb[0].mxu0
      %v711 = vadd.f32 0.0, %v710
      %v712 = vpop.f32.mrb[0].mxu0
      %v713 = vadd.f32 0.0, %v712
      %v714 = vpop.f32.mrb[0].mxu0
      %v715 = vadd.f32 0.0, %v714
      %716 = vdwg.mxu0
      %717 = vmatprep.subr.bf16.mxu0 0
      %718 = vmatpush1.bf16.msra.mxu0 %v628
      %719 = vmatprep.subr.bf16.mxu0 0
      %720 = vmatpush1.bf16.msra.mxu0 %v631
      %721 = vmatprep.subr.bf16.mxu0 0
      %722 = vmatpush1.bf16.msra.mxu0 %v634
      %723 = vmatprep.subr.bf16.mxu0 0
      %724 = vmatpush1.bf16.msra.mxu0 %v637
      %725 = vmatprep.subr.bf16.mxu0 0
      %726 = vmatpush1.bf16.msra.mxu0 %v640
      %727 = vmatprep.subr.bf16.mxu0 0
      %728 = vmatpush1.bf16.msra.mxu0 %v643
      %729 = vmatprep.subr.bf16.mxu0 0
      %730 = vmatpush1.bf16.msra.mxu0 %v646
      %731 = vmatprep.subr.bf16.mxu0 0
      %732 = vmatpush1.bf16.msra.mxu0 %v649
      %733 = vmatprep.subr.bf16.mxu0 0
      %734 = vmatpush1.bf16.msra.mxu0 0
      %735 = vmatprep.subr.bf16.mxu0 0
      %736 = vmatpush1.bf16.msra.mxu0 0
      %737 = vmatprep.subr.bf16.mxu0 0
      %738 = vmatpush1.bf16.msra.mxu0 0
      %739 = vmatprep.subr.bf16.mxu0 0
      %740 = vmatpush1.bf16.msra.mxu0 0
      %741 = vmatprep.subr.bf16.mxu0 0
      %742 = vmatpush1.bf16.msra.mxu0 0
      %743 = vmatprep.subr.bf16.mxu0 0
      %744 = vmatpush1.bf16.msra.mxu0 0
      %745 = vmatprep.subr.bf16.mxu0 0
      %746 = vmatpush1.bf16.msra.mxu0 0
      %747 = vmatprep.subr.bf16.mxu0 0
      %748 = vmatpush1.bf16.msra.mxu0 0
      %749 = vmatprep.mubr.bf16.mxu0 0
      %750 = vmatmul.mubr.bf16.gmra.mrb[0].mxu0 %v513
      %v751 = vpop.f32.mrb[0].mxu0
      %v752 = vadd.f32 0.0, %v751
      %v753 = vpop.f32.mrb[0].mxu0
      %v754 = vpop.f32.mrb[0].mxu0
      %v755 = vadd.f32 0.0, %v754
      %v756 = vpop.f32.mrb[0].mxu0
      %757 = vdwg.mxu0
      %v760 = vrot.slane %v709, 7
      %v761 = vrot.slane %v713, 7
      %v762 = vsel %vm482, %v760, %v761
      %v765 = vsel %vm482, 0.0, %v760
      %v766 = vadd.f32 %v765, %v711
      %v767 = vadd.f32 %v762, %v715
      %v770 = vrot.slane %v752, 1
      %v771 = vrot.slane %v755, 1
      %v772 = vsel %vm493, %v770, %v771
      %v775 = vsel %vm493, %v771, 0.0
      %v776 = vadd.f32 %v766, %v772
      %v777 = vadd.f32 %v767, %v775
      %v778 = vld [vmem:[%s4] sm:$0x1]
      %v780 = vlaneseq
      %v781 = vshrl.u32 %v780, 7
      %v782 = vsub.s32 0, %v781
      %v783 = vrot.slane %v778, %v782
      %v785 = vadd.f32 %v776, %v783
      %v786 = vadd.f32 %v777, %v783
      %v787 = vadd.f32 %v785, %v228
      %v788 = vadd.f32 %v786, %v229
      %v789 = vmax.f32 %v787, 0.0
      %v790 = vmax.f32 %v788, 0.0
      %791 = vst [vmem:[%s224] sm:$0xff] %v789
      %792 = vst [vmem:[%s224 + $0x8] sm:$0xff] %v790
      %p793 = scmp.lt.s32.totalorder %s16, 1
      %s794 = scalar_select %p793, %s16, 1
      %s795 = smul.addr %s794, 2
      %s796 = smul.addr %s795, 8
      %s797 = scalar_lea.vmem %s5, %s796
      // Predicated region
      $region41: #{basic_block_pallas.1} parent=39 // pred_check
        %p798 = pneg %p144
      $region42: #{basic_block_pallas.1} parent=39 // pred_check_branch
        %800 = sbr.rel (%p798) target = $region44
      $region43: #{basic_block_pallas.1} parent=39 // pred_region
        _
      $region44: #{basic_block_pallas.1} parent=39 // pred_fallthru
        _
    $region40: #{basic_block_pallas.1} parent=5 // pred_fallthru
      _
    %p801 = scmp.le.s32.totalorder 2, %s11
    // Predicated region
    $region45: #{basic_block_pallas.1} parent=5 // pred_check
      %p802 = pneg %p801
    $region46: #{basic_block_pallas.1} parent=5 // pred_check_branch
      %804 = sbr.rel (%p802) target = $region48
    $region47: #{basic_block_pallas.1} parent=5 // pred_region
      %s805 = ssub.s32 %s11, 2
      // Predicated region
      $region49: #{basic_block_pallas.1} parent=47 // pred_check
        %p806 = pneg %p150
      $region50: #{basic_block_pallas.1} parent=47 // pred_check_branch
        %808 = sbr.rel (%p806) target = $region52
      $region51: #{basic_block_pallas.1} parent=47 // pred_region
        %p809 = scmp.lt.s32.totalorder %s17, 1
        %s810 = scalar_select %p809, %s17, 1
        %s811 = smul.addr %s810, 2
        %s812 = smul.addr %s811, 8
        %s813 = scalar_lea.vmem %s5, %s812
      $region52: #{basic_block_pallas.1} parent=47 // pred_fallthru
        _
    $region48: #{basic_block_pallas.1} parent=5 // pred_fallthru
      _
  $region6: #{basic_block_pallas.1} parent=0 // loop_footer
    %s15 = sadd.s32 1, %s11
  $region7: #{basic_block_pallas.1} parent=0 // loop_footer_branch
    %10 = sbr.rel target = $region3
  $region8: #{basic_block_pallas.1} parent=0 // loop_exit
    _

</llo_original>
